<compile_context>
chip_gen: v5e
topology: v5e:2x2
jax: 0.10.0
libtpu: 0.0.40
codegen_flags: <defaults>
</compile_context>

<pallas_src>
import functools

import jax
import jax.numpy as jnp
from jax import lax
from jax.experimental import pallas as pl
from jax.experimental.pallas import tpu as pltpu


def _round_up(x, m):
    return ((x + m - 1) // m) * m


def _downsample_kernel(xs_ref, w_ref, b_ref, o_ref, *, Wp, L):
    # xs_ref: (1, 4*Cin, S_pad)  space-to-depth(2) of the padded input, spatial on lanes
    # w_ref : (Cout, 16*Cin)     weight-norm + gamma + all 9 taps folded into K
    # b_ref : (Cout, 1)          gamma*bias + beta
    # o_ref : (1, Cout, L)       L = Ho*Wp (padded-width rows; wrapper trims 1 column)
    wins = [xs_ref[0, :, off:off + L] for off in (0, 1, Wp, Wp + 1)]
    patch = jnp.concatenate(wins, axis=0)                      # (16*Cin, L)
    acc = jnp.dot(w_ref[...], patch,
                  preferred_element_type=jnp.float32)          # (Cout, L) on the MXU
    o_ref[0] = (acc + b_ref[...]).astype(o_ref.dtype)


def downsample_forward(x, params):
    """Pallas equivalent of Downsample(channels, out_channels).forward(x), NCHW in/out."""
    v, g, bias, gamma, beta = params   # torch shapes: v (Cout,Cin,3,3), g (Cout,1,1,1),
                                       # bias (Cout,), gamma/beta (1,Cout,1,1)
    N, Cin, H, W = x.shape
    Cout = v.shape[0]
    Ho = (H + 2 - 3) // 2 + 1          # conv output extents (stride 2, pad 1, k 3)
    Wo = (W + 2 - 3) // 2 + 1
    Hp, Wp = Ho + 1, Wo + 1            # space-to-depth phase-grid extents
    L = Ho * Wp

    # ---- fold weight_norm (dim=0) + conv bias + gamma/beta affine, host-side ----
    norm = jnp.sqrt(jnp.sum(v * v, axis=(1, 2, 3), keepdims=True))
    norm = jnp.maximum(norm, 1e-12)    # guard zero-norm channel (negligible otherwise)
    gvec = gamma.reshape(Cout)
    w_eff = gvec.reshape(Cout, 1, 1, 1) * g * v / norm                 # (Cout, Cin, 3, 3)
    b_eff = (gvec * bias.reshape(Cout) + beta.reshape(Cout)).reshape(Cout, 1)

    # ---- rearrange the 9 stride-2 taps into one (Cout, 16*Cin) matmul weight ----
    # stride-2 3x3 conv == stride-1 2x2 conv over the 2x2 space-to-depth phases:
    # tap (dy,dx) -> shift (dy//2, dx//2), phase (dy%2, dx%2); unused slots stay zero.
    w2 = jnp.zeros((2, 2, 2, 2, Cin, Cout), w_eff.dtype)       # [ky, kx, py, px, c, o]
    for dy in range(3):
        for dx in range(3):
            w2 = w2.at[dy // 2, dx // 2, dy % 2, dx % 2].set(w_eff[:, :, dy, dx].T)
    w_all = jnp.transpose(w2, (5, 0, 1, 2, 3, 4)).reshape(Cout, 16 * Cin)

    # ---- pad + space-to-depth(2) + flatten spatial: one fused XLA relayout pass ----
    pad_b = 2 * Hp - 1 - H
    pad_r = 2 * Wp - 1 - W
    x_pad = jnp.pad(x, ((0, 0), (0, 0), (1, pad_b), (1, pad_r)))       # conv padding=1
    xs = x_pad.reshape(N, Cin, Hp, 2, Wp, 2)
    xs = jnp.transpose(xs, (0, 3, 5, 1, 2, 4)).reshape(N, 4 * Cin, Hp * Wp)
    S_pad = _round_up(Hp * Wp + 1, 128)    # lane-align + room for the shifted windows
    xs = jnp.pad(xs, ((0, 0), (0, 0), (0, S_pad - Hp * Wp)))

    kernel = functools.partial(_downsample_kernel, Wp=Wp, L=L)
    out_flat = pl.pallas_call(
        kernel,
        out_shape=jax.ShapeDtypeStruct((N, Cout, L), jnp.float32),
        grid_spec=pltpu.PrefetchScalarGridSpec(
            num_scalar_prefetch=0,
            grid=(N,),
            in_specs=[
                pl.BlockSpec((1, 4 * Cin, S_pad), lambda n: (n, 0, 0)),
                pl.BlockSpec((Cout, 16 * Cin), lambda n: (0, 0)),
                pl.BlockSpec((Cout, 1), lambda n: (0, 0)),
            ],
            out_specs=pl.BlockSpec((1, Cout, L), lambda n: (n, 0, 0)),
        ),
        compiler_params=pltpu.CompilerParams(dimension_semantics=("parallel",)),
    )(xs, w_all, b_eff)

    # Drop the single junk column per output row (kept in-kernel so tap windows are
    # contiguous lane slices); pure layout trim on the smallest tensor in the op.
    return out_flat.reshape(N, Cout, Ho, Wp)[:, :, :, :Wo]


def _reference(x, params):
    v, g, bias, gamma, beta = params
    Cout = v.shape[0]
    norm = jnp.sqrt(jnp.sum(v * v, axis=(1, 2, 3), keepdims=True))
    norm = jnp.maximum(norm, 1e-12)
    w = g * v / norm
    out = lax.conv_general_dilated(
        x, w, window_strides=(2, 2), padding=((1, 1), (1, 1)),
        dimension_numbers=("NCHW", "OIHW", "NCHW"),
        precision=lax.Precision.HIGHEST)
    out = out + bias.reshape(1, Cout, 1, 1)
    out = gamma.reshape(1, Cout, 1, 1) * out + beta.reshape(1, Cout, 1, 1)
    return out


if __name__ == "__main__":
    key = jax.random.PRNGKey(0)
    N, C, H, W = 2, 4, 16, 16
    Cout = C   # Downsample(channels=4) with out_channels=None -> out_channels = channels

    k1, k2, k3, k4, k5 = jax.random.split(key, 5)
    x = jax.random.normal(k1, (N, C, H, W), jnp.float32)

    # Parameters shaped as in NormConv2d(__init__) with weight_norm:
    v = jax.random.normal(k2, (Cout, C, 3, 3), jnp.float32) * 0.1        # weight_v
    g = jnp.sqrt(jnp.sum(v * v, axis=(1, 2, 3), keepdims=True))          # weight_g (torch init)
    bias = jax.random.normal(k3, (Cout,), jnp.float32) * 0.1             # conv bias
    gamma = 1.0 + 0.1 * jax.random.normal(k4, (1, Cout, 1, 1), jnp.float32)
    beta = 0.1 * jax.random.normal(k5, (1, Cout, 1, 1), jnp.float32)
    params = (v, g, bias, gamma, beta)

    fwd = jax.jit(downsample_forward)
    out = jax.block_until_ready(fwd(x, params))
    ref = _reference(x, params)

    assert out.shape == (N, Cout, H // 2, W // 2), out.shape
    assert jnp.allclose(out, ref, atol=1e-4, rtol=1e-4), float(jnp.max(jnp.abs(out - ref)))
    print("KERNEL_OK")
</pallas_src>

<mosaic_0001>
module attributes {stable_mosaic.version = 11 : i64} {
  func.func @_downsample_kernel(%arg0: i32, %arg1: memref<1x16x128xf32, #tpu.memory_space<vmem>>, %arg2: memref<4x64xf32, #tpu.memory_space<vmem>>, %arg3: memref<4x1xf32, #tpu.memory_space<vmem>>, %arg4: memref<1x4x72xf32, #tpu.memory_space<vmem>>) attributes {dimension_semantics = [#tpu.dimension_semantics<parallel>], iteration_bounds = array<i64: 2>, scalar_prefetch = 0 : i64, scratch_operands = 0 : i64, tpu.core_type = #tpu.core_type<tc>, window_params = [{transform_indices = @transform_0, window_bounds = array<i64: 1, 16, 128>}, {pipeline_mode = #tpu.pipeline_mode<synchronous>, transform_indices = @transform_1, window_bounds = array<i64: 4, 64>}, {pipeline_mode = #tpu.pipeline_mode<synchronous>, transform_indices = @transform_2, window_bounds = array<i64: 4, 1>}, {transform_indices = @transform_3, window_bounds = array<i64: 1, 4, 72>}]} {
    %c0 = arith.constant 0 : index
    %c0_0 = arith.constant 0 : index
    %c0_1 = arith.constant 0 : index
    %0 = vector.load %arg1[%c0, %c0_0, %c0_1] : memref<1x16x128xf32, #tpu.memory_space<vmem>>, vector<1x16x72xf32>
    %1 = vector.shape_cast %0 : vector<1x16x72xf32> to vector<16x72xf32>
    %c0_2 = arith.constant 0 : index
    %c0_3 = arith.constant 0 : index
    %c1 = arith.constant 1 : index
    %2 = vector.load %arg1[%c0_2, %c0_3, %c1] : memref<1x16x128xf32, #tpu.memory_space<vmem>>, vector<1x16x72xf32>
    %3 = vector.shape_cast %2 : vector<1x16x72xf32> to vector<16x72xf32>
    %c0_4 = arith.constant 0 : index
    %c0_5 = arith.constant 0 : index
    %c9 = arith.constant 9 : index
    %4 = vector.load %arg1[%c0_4, %c0_5, %c9] : memref<1x16x128xf32, #tpu.memory_space<vmem>>, vector<1x16x72xf32>
    %5 = vector.shape_cast %4 : vector<1x16x72xf32> to vector<16x72xf32>
    %c0_6 = arith.constant 0 : index
    %c0_7 = arith.constant 0 : index
    %c10 = arith.constant 10 : index
    %6 = vector.load %arg1[%c0_6, %c0_7, %c10] : memref<1x16x128xf32, #tpu.memory_space<vmem>>, vector<1x16x72xf32>
    %7 = vector.shape_cast %6 : vector<1x16x72xf32> to vector<16x72xf32>
    %8 = tpu.concatenate %1, %3, %5, %7 in 0 : vector<16x72xf32>, vector<16x72xf32>, vector<16x72xf32>, vector<16x72xf32> -> vector<64x72xf32>
    %c0_8 = arith.constant 0 : index
    %c0_9 = arith.constant 0 : index
    %9 = vector.load %arg2[%c0_8, %c0_9] : memref<4x64xf32, #tpu.memory_space<vmem>>, vector<4x64xf32>
    %cst = arith.constant dense<0.000000e+00> : vector<4x72xf32>
    %10 = tpu.matmul %9, %8, %cst {dimension_numbers = #tpu.dot_dimension_numbers<[1], [0], [0], [1], [0, 0, 1, 1], [], []>} : vector<4x64xf32>, vector<64x72xf32>, vector<4x72xf32> -> vector<4x72xf32>
    %c0_10 = arith.constant 0 : index
    %c0_11 = arith.constant 0 : index
    %11 = vector.load %arg3[%c0_10, %c0_11] : memref<4x1xf32, #tpu.memory_space<vmem>>, vector<4x1xf32>
    %12 = vector.broadcast %11 : vector<4x1xf32> to vector<4x72xf32>
    %13 = arith.addf %10, %12 : vector<4x72xf32>
    %c0_12 = arith.constant 0 : index
    %c0_13 = arith.constant 0 : index
    %c0_14 = arith.constant 0 : index
    %14 = vector.load %arg4[%c0_12, %c0_13, %c0_14] : memref<1x4x72xf32, #tpu.memory_space<vmem>>, vector<1x4x72xf32>
    %15 = vector.shape_cast %14 : vector<1x4x72xf32> to vector<4x72xf32>
    %16 = vector.shape_cast %13 : vector<4x72xf32> to vector<1x4x72xf32>
    tpu.vector_store %arg4[%c0_12, %c0_13, %c0_14], %16 {strides = array<i32>} : memref<1x4x72xf32, #tpu.memory_space<vmem>>, vector<1x4x72xf32>,
    return
  }
  func.func @transform_0(%arg0: i32) -> (i32, i32, i32) {
    %c0_i32 = arith.constant 0 : i32
    %c0_i32_0 = arith.constant 0 : i32
    %c0_i32_1 = arith.constant 0 : i32
    return %arg0, %c0_i32, %c0_i32_0 : i32, i32, i32
  }
  func.func @transform_1(%arg0: i32) -> (i32, i32) {
    %c0_i32 = arith.constant 0 : i32
    %c0_i32_0 = arith.constant 0 : i32
    %c0_i32_1 = arith.constant 0 : i32
    return %c0_i32, %c0_i32_0 : i32, i32
  }
  func.func @transform_2(%arg0: i32) -> (i32, i32) {
    %c0_i32 = arith.constant 0 : i32
    %c0_i32_0 = arith.constant 0 : i32
    %c0_i32_1 = arith.constant 0 : i32
    return %c0_i32, %c0_i32_0 : i32, i32
  }
  func.func @transform_3(%arg0: i32) -> (i32, i32, i32) {
    %c0_i32 = arith.constant 0 : i32
    %c0_i32_0 = arith.constant 0 : i32
    %c0_i32_1 = arith.constant 0 : i32
    return %arg0, %c0_i32, %c0_i32_0 : i32, i32, i32
  }
}

</mosaic_0001>

<llo_original>
// kernel: downsample_forward.1
$region0: #{downsample_forward.1}
  #allocation0 [shape = 'u32[]', space=smem, size = 0x4, offset = 0x4, fixed_abs, tag = 'smem constant byte address 0x4 - core index']
  #allocation1 [shape = 'u32[72,128]{1,0:T(1,128)}', space=vmem, size = 0x9000, scoped, tag = 'internal scratch']
  %s0 = inlined_call_operand.vmem [shape: f32[2,16,128], index: 0, kind: input, shape index: {}]
  %s1 = inlined_call_operand.vmem [shape: f32[4,64], index: 1, kind: input, shape index: {}]
  %s2 = inlined_call_operand.vmem [shape: f32[4,1], index: 2, kind: input, shape index: {}]
  %s3 = inlined_call_operand.vmem [shape: f32[2,4,72], index: 3, kind: output, shape index: {}]
  %s4 = sld [smem:[#allocation0]]
  $region45: #{downsample_forward.1} parent=0
    _
  %s6 = ssub.s32 1, %s4
  %s7 = scalar_select 0, %s6, %s4
  loop: start=0, step=1, limit=4
  $region2: #{downsample_forward.1} parent=0 // loop_pre_header
    _
  $region3: #{downsample_forward.1} parent=0 // loop_header
    %s9 = sphi 0, %s13
    %p10 = scmp.ge.s32.totalorder %s9, 4
    %s19 = sphi 0, %s21
    %s22 = sphi 0, %s19
    %s23 = sphi 0, %s22
    %s39 = sphi 0, %s23
    %s43 = sphi 0, %s43
    %s45 = sphi 0, %s43
    %s46 = sphi 0, %s45
    %s60 = sphi 0, %s46
    %s64 = sphi 0, %s64
    %s66 = sphi 0, %s64
    %s67 = sphi 0, %s66
    %s81 = sphi 0, %s67
    %s87 = sphi 0, %s89
    %s90 = sphi 0, %s87
    %s91 = sphi 0, %s90
    %s107 = sphi 0, %s91
  $region4: #{downsample_forward.1} parent=0 // loop_header_branch
    %12 = sbr.rel (%p10) target = $region8
  $region5: #{downsample_forward.1} parent=0 // loop_body
    %s14 = ssub.s32 %s9, 1
    %s15 = ssub.s32 %s9, 2
    %s16 = sadd.s32 %s9, 1
    %s17 = ssub.s32 %s9, %s16
    %p18 = scmp.eq.s32.totalorder %s17, 0
    %s20 = sadd.s32 %s19, 1
    %s21 = scalar_select %p18, %s19, %s20
    %p24 = pneg %p18
    %p25 = scmp.eq.s32.totalorder %s9, 1
    %p26 = por %p24, %p25
    %p27 = scmp.ne.s32.totalorder %s19, %s22
    %p28 = scmp.eq.s32.totalorder %s9, 0
    %p29 = por %p27, %p28
    %p30 = scmp.ne.s32.totalorder %s19, %s22
    %p31 = scmp.eq.s32.totalorder %s14, 1
    %p32 = por %p30, %p31
    %p33 = scmp.ne.s32.totalorder %s22, %s23
    %p34 = scmp.eq.s32.totalorder %s14, 0
    %p35 = por %p33, %p34
    %p36 = scmp.ne.s32.totalorder %s22, %s23
    %p37 = scmp.eq.s32.totalorder %s15, 1
    %p38 = por %p36, %p37
    %p40 = scmp.ne.s32.totalorder %s23, %s39
    %p41 = scmp.eq.s32.totalorder %s15, 0
    %p42 = por %p40, %p41
    %s44 = sadd.s32 %s43, 1
    %p47 = scmp.eq.s32.totalorder %s9, 1
    %p48 = scmp.ne.s32.totalorder %s43, %s45
    %p49 = scmp.eq.s32.totalorder %s9, 0
    %p50 = por %p48, %p49
    %p51 = scmp.ne.s32.totalorder %s43, %s45
    %p52 = scmp.eq.s32.totalorder %s14, 1
    %p53 = por %p51, %p52
    %p54 = scmp.ne.s32.totalorder %s45, %s46
    %p55 = scmp.eq.s32.totalorder %s14, 0
    %p56 = por %p54, %p55
    %p57 = scmp.ne.s32.totalorder %s45, %s46
    %p58 = scmp.eq.s32.totalorder %s15, 1
    %p59 = por %p57, %p58
    %p61 = scmp.ne.s32.totalorder %s46, %s60
    %p62 = scmp.eq.s32.totalorder %s15, 0
    %p63 = por %p61, %p62
    %s65 = sadd.s32 %s64, 1
    %p68 = scmp.eq.s32.totalorder %s9, 1
    %p69 = scmp.ne.s32.totalorder %s64, %s66
    %p70 = scmp.eq.s32.totalorder %s9, 0
    %p71 = por %p69, %p70
    %p72 = scmp.ne.s32.totalorder %s64, %s66
    %p73 = scmp.eq.s32.totalorder %s14, 1
    %p74 = por %p72, %p73
    %p75 = scmp.ne.s32.totalorder %s66, %s67
    %p76 = scmp.eq.s32.totalorder %s14, 0
    %p77 = por %p75, %p76
    %p78 = scmp.ne.s32.totalorder %s66, %s67
    %p79 = scmp.eq.s32.totalorder %s15, 1
    %p80 = por %p78, %p79
    %p82 = scmp.ne.s32.totalorder %s67, %s81
    %p83 = scmp.eq.s32.totalorder %s15, 0
    %p84 = por %p82, %p83
    %s85 = ssub.s32 %s9, %s16
    %p86 = scmp.eq.s32.totalorder %s85, 0
    %s88 = sadd.s32 %s87, 1
    %s89 = scalar_select %p86, %s87, %s88
    %p92 = pneg %p86
    %p93 = scmp.eq.s32.totalorder %s9, 1
    %p94 = por %p92, %p93
    %p95 = scmp.ne.s32.totalorder %s87, %s90
    %p96 = scmp.eq.s32.totalorder %s9, 0
    %p97 = por %p95, %p96
    %p98 = scmp.ne.s32.totalorder %s87, %s90
    %p99 = scmp.eq.s32.totalorder %s14, 1
    %p100 = por %p98, %p99
    %p101 = scmp.ne.s32.totalorder %s90, %s91
    %p102 = scmp.eq.s32.totalorder %s14, 0
    %p103 = por %p101, %p102
    %p104 = scmp.ne.s32.totalorder %s90, %s91
    %p105 = scmp.eq.s32.totalorder %s15, 1
    %p106 = por %p104, %p105
    %p108 = scmp.ne.s32.totalorder %s91, %s107
    %p109 = scmp.eq.s32.totalorder %s15, 0
    %p110 = por %p108, %p109
    %p111 = scmp.le.s32.totalorder 1, %s9
    %p112 = scmp.lt.s32.totalorder %s9, 3
    %p113 = pnand %p111, %p112
    %p114 = pneg %p113
    // Predicated region
    $region9: #{downsample_forward.1} parent=5 // pred_check
      _
    $region10: #{downsample_forward.1} parent=5 // pred_check_branch
      %116 = sbr.rel (%p113) target = $region12
    $region11: #{downsample_forward.1} parent=5 // pred_region
      %s117 = ssub.s32 %s9, 1
      // Predicated region
      $region13: #{downsample_forward.1} parent=11 // pred_check
        %p118 = pneg %p56
      $region14: #{downsample_forward.1} parent=11 // pred_check_branch
        %120 = sbr.rel (%p118) target = $region16
      $region15: #{downsample_forward.1} parent=11 // pred_region
        _
      $region16: #{downsample_forward.1} parent=11 // pred_fallthru
        _
      // Predicated region
      $region17: #{downsample_forward.1} parent=11 // pred_check
        %p121 = pneg %p77
      $region18: #{downsample_forward.1} parent=11 // pred_check_branch
        %123 = sbr.rel (%p121) target = $region20
      $region19: #{downsample_forward.1} parent=11 // pred_region
        _
      $region20: #{downsample_forward.1} parent=11 // pred_fallthru
        _
    $region12: #{downsample_forward.1} parent=5 // pred_fallthru
      _
    %p124 = scmp.lt.s32.totalorder %s9, 2
    // Predicated region
    $region21: #{downsample_forward.1} parent=5 // pred_check
      %p125 = pneg %p124
    $region22: #{downsample_forward.1} parent=5 // pred_check_branch
      %127 = sbr.rel (%p125) target = $region24
    $region23: #{downsample_forward.1} parent=5 // pred_region
      // Predicated region
      $region25: #{downsample_forward.1} parent=23 // pred_check
        %p128 = pneg %p29
      $region26: #{downsample_forward.1} parent=23 // pred_check_branch
        %130 = sbr.rel (%p128) target = $region28
      $region27: #{downsample_forward.1} parent=23 // pred_region
        %p131 = scmp.lt.s32.totalorder %s9, 1
        %s132 = scalar_select %p131, %s9, 1
        %s133 = smul.addr %s132, 2
        %s134 = smul.addr %s133, 8
        %s135 = scalar_lea.vmem %s0, %s134
      $region28: #{downsample_forward.1} parent=23 // pred_fallthru
        _
    $region24: #{downsample_forward.1} parent=5 // pred_fallthru
      _
    %p136 = scmp.le.s32.totalorder 1, %s9
    %p137 = scmp.lt.s32.totalorder %s9, 3
    %p138 = pnand %p136, %p137
    %p139 = pneg %p138
    // Predicated region
    $region29: #{downsample_forward.1} parent=5 // pred_check
      _
    $region30: #{downsample_forward.1} parent=5 // pred_check_branch
      %141 = sbr.rel (%p138) target = $region32
    $region31: #{downsample_forward.1} parent=5 // pred_region
      %s142 = ssub.s32 %s9, 1
      %p143 = scmp.lt.s32.totalorder %s14, 1
      %s144 = scalar_select %p143, %s14, 1
      %s145 = smul.addr %s144, 2
      %s146 = smul.addr %s145, 8
      %s147 = scalar_lea.vmem %s0, %s146
      %p148 = pneg %p35
      %p149 = pneg %p32
      %p150 = pneg %p56
      %p151 = pneg %p53
      %p152 = pneg %p77
      %p153 = pneg %p74
      %p154 = pneg %p103
      %p155 = pneg %p100
      %p156 = scmp.lt.s32.totalorder %s14, 1
      %s157 = scalar_select %p156, %s14, 1
      %s158 = smul.addr %s157, 4
      %s159 = scalar_lea.vmem %s3, %s158
      %p160 = scmp.lt.s32.totalorder %s14, 1
      %s161 = scalar_select %p160, %s14, 1
      %s162 = smul.addr %s161, 2
      %s163 = smul.addr %s162, 8
      %s164 = scalar_lea.vmem %s0, %s163
      %p165 = scmp.lt.s32.totalorder %s14, 1
      %s166 = scalar_select %p165, %s14, 1
      %s167 = smul.addr %s166, 4
      %s168 = scalar_lea.vmem %s3, %s167
      %v169 = vld [vmem:[%s164] sm:$0xff]
      %v170 = vld [vmem:[%s164 + $0x8] sm:$0xff]
      %173 = vrot.lane.b32.xlu0 %v169, 127
      %v174 = vpop.permute.xlu0 %173
      %175 = vrot.lane.b32.xlu0 %v170, 127
      %v176 = vpop.permute.xlu0 %175
      %179 = vrot.lane.b32.xlu0 %v169, 119
      %v180 = vpop.permute.xlu0 %179
      %181 = vrot.lane.b32.xlu0 %v170, 119
      %v182 = vpop.permute.xlu0 %181
      %185 = vrot.lane.b32.xlu0 %v169, 118
      %v186 = vpop.permute.xlu0 %185
      %187 = vrot.lane.b32.xlu0 %v170, 118
      %v188 = vpop.permute.xlu0 %187
      %v191 = vld [vmem:[%s1] sm:$0xf]
      %v192 = vld [vmem:[%s2] sm:$0xf]
      %194 = vset.pattern.permute.xlu0 0
      %195 = vperm.xlu0 %194, %v192
      %v196 = vpop.permute.xlu0 %195
      %vm198 = vcmask 523264
      %v200 = vsel %vm198, %v191, 0
      %202 = vmatpush.msra.mxu0 0.0
      %203 = vmatpush.msra.mxu0 0.0
      %204 = vmatpush.msra.mxu0 0.0
      %205 = vmatpush.msra.mxu0 0.0
      %206 = vmatpush.msra.mxu0 0.0
      %207 = vmatpush.msra.mxu0 0.0
      %208 = vmatpush.msra.mxu0 0.0
      %209 = vmatpush.msra.mxu0 0.0
      %210 = vmatpush.msra.mxu0 %v188
      %211 = vmatpush.msra.mxu0 %v186
      %212 = vmatpush.msra.mxu0 %v182
      %213 = vmatpush.msra.mxu0 %v180
      %214 = vmatpush.msra.mxu0 %v176
      %215 = vmatpush.msra.mxu0 %v174
      %216 = vmatpush.msra.mxu0 %v170
      %217 = vmatpush.msra.mxu0 %v169
      %218 = vmatmul.f32.gmra.mxu0 %v200
      %v219 = vpop.f32.mrf.mxu0
      %v220 = vadd.f32 %v196, %v219
      %221 = vdwg.mxu0
      %vm222 = vcmask 584704
      %223 = vst.msk [vmem:[%s168] sm:$0xf] %vm222, %v220
      %p224 = scmp.lt.s32.totalorder %s14, 1
      %s225 = scalar_select %p224, %s14, 1
      %s226 = smul.addr %s225, 4
      %s227 = scalar_lea.vmem %s3, %s226
      // Predicated region
      $region33: #{downsample_forward.1} parent=31 // pred_check
        %p228 = pneg %p100
      $region34: #{downsample_forward.1} parent=31 // pred_check_branch
        %230 = sbr.rel (%p228) target = $region36
      $region35: #{downsample_forward.1} parent=31 // pred_region
        _
      $region36: #{downsample_forward.1} parent=31 // pred_fallthru
        _
    $region32: #{downsample_forward.1} parent=5 // pred_fallthru
      _
    %p231 = scmp.le.s32.totalorder 2, %s9
    // Predicated region
    $region37: #{downsample_forward.1} parent=5 // pred_check
      %p232 = pneg %p231
    $region38: #{downsample_forward.1} parent=5 // pred_check_branch
      %234 = sbr.rel (%p232) target = $region40
    $region39: #{downsample_forward.1} parent=5 // pred_region
      %s235 = ssub.s32 %s9, 2
      // Predicated region
      $region41: #{downsample_forward.1} parent=39 // pred_check
        %p236 = pneg %p106
      $region42: #{downsample_forward.1} parent=39 // pred_check_branch
        %238 = sbr.rel (%p236) target = $region44
      $region43: #{downsample_forward.1} parent=39 // pred_region
        %p239 = scmp.lt.s32.totalorder %s15, 1
        %s240 = scalar_select %p239, %s15, 1
        %s241 = smul.addr %s240, 4
        %s242 = scalar_lea.vmem %s3, %s241
      $region44: #{downsample_forward.1} parent=39 // pred_fallthru
        _
    $region40: #{downsample_forward.1} parent=5 // pred_fallthru
      _
  $region6: #{downsample_forward.1} parent=0 // loop_footer
    %s13 = sadd.s32 1, %s9
  $region7: #{downsample_forward.1} parent=0 // loop_footer_branch
    %8 = sbr.rel target = $region3
  $region8: #{downsample_forward.1} parent=0 // loop_exit
    _

</llo_original>
